<compile_context>
chip_gen: v5e
topology: v5e:2x2
jax: 0.10.0
libtpu: 0.0.40
codegen_flags: <defaults>
</compile_context>

<pallas_src>
import functools

import jax
import jax.numpy as jnp
from jax.experimental import pallas as pl
from jax.experimental.pallas import tpu as pltpu

_LANE = 128


def _round_up(x, m):
    return ((x + m - 1) // m) * m


def _gated_conv_kernel(x_ref, w_ref, b_ref, o_ref, *, oc):
    # x_ref: (Kp, tm)   im2col^T tile (M on lanes)
    # w_ref: (2*oc, Kp) packed [Wh; Wg] (resident across the grid)
    # b_ref: (2*oc, 1)  packed [bh; bg] (resident)
    # o_ref: (oc, tm)   gated output tile (lane-dense, no channel padding)
    y = jnp.dot(w_ref[...], x_ref[...], preferred_element_type=jnp.float32)
    y = y + b_ref[...]                 # lane-broadcast of the bias column
    h = y[:oc, :]                      # sublane split at oc (exact f32 tile)
    g = y[oc:, :]
    # activation is None in the reference module, so h is used as-is.
    o_ref[...] = h * jax.nn.sigmoid(g)


def pack_gated_conv_params(wh, bh, wg, bg):
    """One-time packing of the two conv weights/biases (hoisted out of forward).

    Returns:
      w_packed: (2*OC, Kp) f32; rows [0,OC) = Wh, rows [OC,2*OC) = Wg, with
                K = C*KH*KW zero-padded to Kp = round_up(K, 128).
      b_packed: (2*OC, 1) f32; [bh; bg].
    """
    OC, C, KH, KW = wh.shape
    K = C * KH * KW
    Kp = _round_up(K, _LANE)
    w_packed = jnp.concatenate(
        [wh.reshape(OC, K), wg.reshape(OC, K)], axis=0).astype(jnp.float32)
    w_packed = jnp.pad(w_packed, ((0, 0), (0, Kp - K)))
    b_packed = jnp.concatenate([bh, bg], axis=0).reshape(2 * OC, 1)
    return w_packed, b_packed.astype(jnp.float32)


def _im2col_t(x, kernel_size, stride, padding, dilation):
    """NCHW input -> transposed patch matrix (C*KH*KW, N*OH*OW). XLA glue."""
    N, C, H, W = x.shape
    KH, KW = kernel_size
    x_pad = jnp.pad(x, ((0, 0), (0, 0), (padding, padding), (padding, padding)))
    OH = (H + 2 * padding - dilation * (KH - 1) - 1) // stride + 1
    OW = (W + 2 * padding - dilation * (KW - 1) - 1) // stride + 1
    patches = []
    for kh in range(KH):
        for kw in range(KW):
            hs = kh * dilation
            ws = kw * dilation
            patches.append(
                x_pad[:, :,
                      hs:hs + stride * (OH - 1) + 1:stride,
                      ws:ws + stride * (OW - 1) + 1:stride])  # (N, C, OH, OW)
    cols = jnp.stack(patches, axis=2)        # (N, C, KH*KW, OH, OW)
    cols = cols.transpose(1, 2, 0, 3, 4)     # (C, KH*KW, N, OH, OW)
    # K index = c*KH*KW + kh*KW + kw  (matches PyTorch (OC, C, KH, KW) weights)
    cols_t = cols.reshape(C * KH * KW, N * OH * OW)
    return cols_t, OH, OW


@functools.partial(jax.jit,
                   static_argnames=("kernel_size", "stride", "padding",
                                    "dilation", "tm"))
def gated_conv2d(x, w_packed, b_packed, *, kernel_size, stride, padding,
                 dilation=1, tm=None):
    """Forward pass of GatedConv2d (activation=None). x: NCHW float32."""
    N, C, H, W = x.shape
    KH, KW = kernel_size
    two_oc, Kp = w_packed.shape
    OC = two_oc // 2
    K = C * KH * KW
    assert Kp == _round_up(K, _LANE), (Kp, K)

    cols_t, OH, OW = _im2col_t(x.astype(jnp.float32), (KH, KW), stride,
                               padding, dilation)
    M = cols_t.shape[1]

    if tm is None:
        # One big tile for small M (fewer grid-step overheads on 1-TC
        # v5e/v6e); capped at 2048 so large M still gives >=2 steps per
        # v7x TensorCore.
        tm = min(_round_up(M, _LANE), 2048)
    M_pad = _round_up(M, tm)

    # Zero-pad K -> Kp (keeps the MXU matmul fully tile-aligned) and, only
    # if needed, M -> M_pad.  Padded M lanes yield bias-only garbage
    # (bh * sigmoid(bg)) which the [:, :M] slice below discards.
    if Kp != K or M_pad != M:
        cols_t = jnp.pad(cols_t, ((0, Kp - K), (0, M_pad - M)))

    grid = (M_pad // tm,)

    out = pl.pallas_call(
        functools.partial(_gated_conv_kernel, oc=OC),
        out_shape=jax.ShapeDtypeStruct((OC, M_pad), jnp.float32),
        grid_spec=pltpu.PrefetchScalarGridSpec(
            num_scalar_prefetch=0,
            grid=grid,
            in_specs=[
                pl.BlockSpec((Kp, tm), lambda i: (0, i)),        # X^T tile
                pl.BlockSpec((two_oc, Kp), lambda i: (0, 0)),    # packed [Wh;Wg]
                pl.BlockSpec((two_oc, 1), lambda i: (0, 0)),     # packed [bh;bg]
            ],
            out_specs=pl.BlockSpec((OC, tm), lambda i: (0, i)),  # lane-dense out
        ),
        compiler_params=pltpu.CompilerParams(
            dimension_semantics=("parallel",),
        ),
    )(cols_t, w_packed, b_packed)

    # (OC, M) -> NCHW.  Kept NCHW to match the PyTorch module's output layout;
    # a fused downstream consumer could take (OC, M) directly and skip this.
    out = out[:, :M].reshape(OC, N, OH, OW).transpose(1, 0, 2, 3)
    return out


def _reference(x, wh, bh, wg, bg, *, stride, padding, dilation=1):
    """Pure-JAX reference (lax conv) for correctness checking."""
    def conv(w, b):
        y = jax.lax.conv_general_dilated(
            x, w,
            window_strides=(stride, stride),
            padding=[(padding, padding), (padding, padding)],
            rhs_dilation=(dilation, dilation),
            dimension_numbers=("NCHW", "OIHW", "NCHW"))
        return y + b[None, :, None, None]
    h = conv(wh, bh)
    g = jax.nn.sigmoid(conv(wg, bg))
    return h * g


if __name__ == "__main__":
    # Module config (small, consistent with GatedConv2d usage inside PlanarVAE).
    N, C, H, W = 2, 4, 16, 16
    OC, KS, STRIDE, PAD, DIL = 8, 3, 1, 1, 1

    key = jax.random.PRNGKey(0)
    kx, kwh, kbh, kwg, kbg = jax.random.split(key, 5)

    x = jax.random.normal(kx, (N, C, H, W), dtype=jnp.float32)

    # Deterministic PyTorch-style uniform init: U(-1/sqrt(fan_in), 1/sqrt(fan_in)).
    fan_in = C * KS * KS
    bound = 1.0 / (fan_in ** 0.5)
    wh = jax.random.uniform(kwh, (OC, C, KS, KS), jnp.float32, -bound, bound)
    bh = jax.random.uniform(kbh, (OC,), jnp.float32, -bound, bound)
    wg = jax.random.uniform(kwg, (OC, C, KS, KS), jnp.float32, -bound, bound)
    bg = jax.random.uniform(kbg, (OC,), jnp.float32, -bound, bound)

    # Hoisted, one-time parameter packing (not part of the per-call forward).
    w_packed, b_packed = pack_gated_conv_params(wh, bh, wg, bg)
    w_packed, b_packed = jax.block_until_ready((w_packed, b_packed))

    out = gated_conv2d(x, w_packed, b_packed, kernel_size=(KS, KS),
                       stride=STRIDE, padding=PAD, dilation=DIL)
    out = jax.block_until_ready(out)

    ref = _reference(x, wh, bh, wg, bg, stride=STRIDE, padding=PAD, dilation=DIL)
    ref = jax.block_until_ready(ref)

    assert out.shape == (N, OC, H, W), out.shape
    assert jnp.allclose(out, ref, atol=1e-4, rtol=1e-4), float(jnp.max(jnp.abs(out - ref)))

    print("KERNEL_OK")
</pallas_src>

<mosaic_0001>
module attributes {stable_mosaic.version = 11 : i64} {
  func.func @_gated_conv_kernel(%arg0: i32, %arg1: memref<128x512xf32, #tpu.memory_space<vmem>>, %arg2: memref<16x128xf32, #tpu.memory_space<vmem>>, %arg3: memref<16x1xf32, #tpu.memory_space<vmem>>, %arg4: memref<8x512xf32, #tpu.memory_space<vmem>>) attributes {dimension_semantics = [#tpu.dimension_semantics<parallel>], iteration_bounds = array<i64: 1>, scalar_prefetch = 0 : i64, scratch_operands = 0 : i64, tpu.core_type = #tpu.core_type<tc>, window_params = [{transform_indices = @transform_0, window_bounds = array<i64: 128, 512>}, {pipeline_mode = #tpu.pipeline_mode<synchronous>, transform_indices = @transform_1, window_bounds = array<i64: 16, 128>}, {pipeline_mode = #tpu.pipeline_mode<synchronous>, transform_indices = @transform_2, window_bounds = array<i64: 16, 1>}, {transform_indices = @transform_3, window_bounds = array<i64: 8, 512>}]} {
    %c0 = arith.constant 0 : index
    %c0_0 = arith.constant 0 : index
    %0 = vector.load %arg2[%c0, %c0_0] : memref<16x128xf32, #tpu.memory_space<vmem>>, vector<16x128xf32>
    %c0_1 = arith.constant 0 : index
    %c0_2 = arith.constant 0 : index
    %1 = vector.load %arg1[%c0_1, %c0_2] : memref<128x512xf32, #tpu.memory_space<vmem>>, vector<128x512xf32>
    %cst = arith.constant dense<0.000000e+00> : vector<16x512xf32>
    %2 = tpu.matmul %0, %1, %cst {dimension_numbers = #tpu.dot_dimension_numbers<[1], [0], [0], [1], [0, 0, 1, 1], [], []>} : vector<16x128xf32>, vector<128x512xf32>, vector<16x512xf32> -> vector<16x512xf32>
    %c0_3 = arith.constant 0 : index
    %c0_4 = arith.constant 0 : index
    %3 = vector.load %arg3[%c0_3, %c0_4] : memref<16x1xf32, #tpu.memory_space<vmem>>, vector<16x1xf32>
    %4 = vector.broadcast %3 : vector<16x1xf32> to vector<16x512xf32>
    %5 = arith.addf %2, %4 : vector<16x512xf32>
    %6 = vector.extract_strided_slice %5 {offsets = [0, 0], sizes = [8, 512], strides = [1, 1]} : vector<16x512xf32> to vector<8x512xf32>
    %7 = vector.extract_strided_slice %5 {offsets = [8, 0], sizes = [8, 512], strides = [1, 1]} : vector<16x512xf32> to vector<8x512xf32>
    %8 = arith.negf %7 : vector<8x512xf32>
    %9 = math.exp %8 : vector<8x512xf32>
    %cst_5 = arith.constant 1.000000e+00 : f32
    %10 = vector.broadcast %cst_5 : f32 to vector<8x512xf32>
    %11 = arith.addf %10, %9 : vector<8x512xf32>
    %12 = arith.divf %10, %11 : vector<8x512xf32>
    %13 = arith.mulf %6, %12 : vector<8x512xf32>
    %c0_6 = arith.constant 0 : index
    %c0_7 = arith.constant 0 : index
    %14 = vector.load %arg4[%c0_6, %c0_7] : memref<8x512xf32, #tpu.memory_space<vmem>>, vector<8x512xf32>
    tpu.vector_store %arg4[%c0_6, %c0_7], %13 {strides = array<i32>} : memref<8x512xf32, #tpu.memory_space<vmem>>, vector<8x512xf32>,
    return
  }
  func.func @transform_0(%arg0: i32) -> (i32, i32) {
    %c0_i32 = arith.constant 0 : i32
    %c0_i32_0 = arith.constant 0 : i32
    return %c0_i32, %arg0 : i32, i32
  }
  func.func @transform_1(%arg0: i32) -> (i32, i32) {
    %c0_i32 = arith.constant 0 : i32
    %c0_i32_0 = arith.constant 0 : i32
    %c0_i32_1 = arith.constant 0 : i32
    return %c0_i32, %c0_i32_0 : i32, i32
  }
  func.func @transform_2(%arg0: i32) -> (i32, i32) {
    %c0_i32 = arith.constant 0 : i32
    %c0_i32_0 = arith.constant 0 : i32
    %c0_i32_1 = arith.constant 0 : i32
    return %c0_i32, %c0_i32_0 : i32, i32
  }
  func.func @transform_3(%arg0: i32) -> (i32, i32) {
    %c0_i32 = arith.constant 0 : i32
    %c0_i32_0 = arith.constant 0 : i32
    return %c0_i32, %arg0 : i32, i32
  }
}

</mosaic_0001>

<llo_original>
// kernel: gated_conv2d.1
$region0: #{gated_conv2d.1}
  #allocation0 [shape = 'u32[]', space=smem, size = 0x4, offset = 0x4, fixed_abs, tag = 'smem constant byte address 0x4 - core index']
  #allocation1 [shape = 'u32[72,128]{1,0:T(1,128)}', space=vmem, size = 0x9000, scoped, tag = 'internal scratch']
  %s0 = inlined_call_operand.vmem [shape: f32[128,512], index: 0, kind: input, shape index: {}]
  %s1 = inlined_call_operand.vmem [shape: f32[16,128], index: 1, kind: input, shape index: {}]
  %s2 = inlined_call_operand.vmem [shape: f32[16,1], index: 2, kind: input, shape index: {}]
  %s3 = inlined_call_operand.vmem [shape: f32[8,512], index: 3, kind: output, shape index: {}]
  %s4 = sld [smem:[#allocation0]]
  $region22: #{gated_conv2d.1} parent=0
    _
  %s6 = ssub.s32 1, %s4
  %s7 = scalar_select 0, %s6, %s4
  // Predicated region
  $region2: #{gated_conv2d.1} parent=0 // pred_check
    _
  $region3: #{gated_conv2d.1} parent=0 // pred_check_branch
    %9 = sbr.rel (0) target = $region5
  $region4: #{gated_conv2d.1} parent=0 // pred_region
    _
  $region5: #{gated_conv2d.1} parent=0 // pred_fallthru
    _
  // Predicated region
  $region6: #{gated_conv2d.1} parent=0 // pred_check
    _
  $region7: #{gated_conv2d.1} parent=0 // pred_check_branch
    %11 = sbr.rel (0) target = $region9
  $region8: #{gated_conv2d.1} parent=0 // pred_region
    _
  $region9: #{gated_conv2d.1} parent=0 // pred_fallthru
    _
  // Predicated region
  $region10: #{gated_conv2d.1} parent=0 // pred_check
    _
  $region11: #{gated_conv2d.1} parent=0 // pred_check_branch
    %13 = sbr.rel (0) target = $region13
  $region12: #{gated_conv2d.1} parent=0 // pred_region
    _
  $region13: #{gated_conv2d.1} parent=0 // pred_fallthru
    _
  %v14 = vld [vmem:[%s1] sm:$0xff]
  %v15 = vld [vmem:[%s1 + $0x8] sm:$0xff]
  %v16 = vld [vmem:[%s0] sm:$0xff]
  %v17 = vld [vmem:[%s0 + $0x8] sm:$0xff]
  %v18 = vld [vmem:[%s0 + $0x10] sm:$0xff]
  %v19 = vld [vmem:[%s0 + $0x18] sm:$0xff]
  %v20 = vld [vmem:[%s0 + $0x20] sm:$0xff]
  %v21 = vld [vmem:[%s0 + $0x28] sm:$0xff]
  %v22 = vld [vmem:[%s0 + $0x30] sm:$0xff]
  %v23 = vld [vmem:[%s0 + $0x38] sm:$0xff]
  %v24 = vld [vmem:[%s0 + $0x40] sm:$0xff]
  %v25 = vld [vmem:[%s0 + $0x48] sm:$0xff]
  %v26 = vld [vmem:[%s0 + $0x50] sm:$0xff]
  %v27 = vld [vmem:[%s0 + $0x58] sm:$0xff]
  %v28 = vld [vmem:[%s0 + $0x60] sm:$0xff]
  %v29 = vld [vmem:[%s0 + $0x68] sm:$0xff]
  %v30 = vld [vmem:[%s0 + $0x70] sm:$0xff]
  %v31 = vld [vmem:[%s0 + $0x78] sm:$0xff]
  %v32 = vld [vmem:[%s0 + $0x80] sm:$0xff]
  %v33 = vld [vmem:[%s0 + $0x88] sm:$0xff]
  %v34 = vld [vmem:[%s0 + $0x90] sm:$0xff]
  %v35 = vld [vmem:[%s0 + $0x98] sm:$0xff]
  %v36 = vld [vmem:[%s0 + $0xa0] sm:$0xff]
  %v37 = vld [vmem:[%s0 + $0xa8] sm:$0xff]
  %v38 = vld [vmem:[%s0 + $0xb0] sm:$0xff]
  %v39 = vld [vmem:[%s0 + $0xb8] sm:$0xff]
  %v40 = vld [vmem:[%s0 + $0xc0] sm:$0xff]
  %v41 = vld [vmem:[%s0 + $0xc8] sm:$0xff]
  %v42 = vld [vmem:[%s0 + $0xd0] sm:$0xff]
  %v43 = vld [vmem:[%s0 + $0xd8] sm:$0xff]
  %v44 = vld [vmem:[%s0 + $0xe0] sm:$0xff]
  %v45 = vld [vmem:[%s0 + $0xe8] sm:$0xff]
  %v46 = vld [vmem:[%s0 + $0xf0] sm:$0xff]
  %v47 = vld [vmem:[%s0 + $0xf8] sm:$0xff]
  %v48 = vld [vmem:[%s0 + $0x100] sm:$0xff]
  %v49 = vld [vmem:[%s0 + $0x108] sm:$0xff]
  %v50 = vld [vmem:[%s0 + $0x110] sm:$0xff]
  %v51 = vld [vmem:[%s0 + $0x118] sm:$0xff]
  %v52 = vld [vmem:[%s0 + $0x120] sm:$0xff]
  %v53 = vld [vmem:[%s0 + $0x128] sm:$0xff]
  %v54 = vld [vmem:[%s0 + $0x130] sm:$0xff]
  %v55 = vld [vmem:[%s0 + $0x138] sm:$0xff]
  %v56 = vld [vmem:[%s0 + $0x140] sm:$0xff]
  %v57 = vld [vmem:[%s0 + $0x148] sm:$0xff]
  %v58 = vld [vmem:[%s0 + $0x150] sm:$0xff]
  %v59 = vld [vmem:[%s0 + $0x158] sm:$0xff]
  %v60 = vld [vmem:[%s0 + $0x160] sm:$0xff]
  %v61 = vld [vmem:[%s0 + $0x168] sm:$0xff]
  %v62 = vld [vmem:[%s0 + $0x170] sm:$0xff]
  %v63 = vld [vmem:[%s0 + $0x178] sm:$0xff]
  %v64 = vld [vmem:[%s0 + $0x180] sm:$0xff]
  %v65 = vld [vmem:[%s0 + $0x188] sm:$0xff]
  %v66 = vld [vmem:[%s0 + $0x190] sm:$0xff]
  %v67 = vld [vmem:[%s0 + $0x198] sm:$0xff]
  %v68 = vld [vmem:[%s0 + $0x1a0] sm:$0xff]
  %v69 = vld [vmem:[%s0 + $0x1a8] sm:$0xff]
  %v70 = vld [vmem:[%s0 + $0x1b0] sm:$0xff]
  %v71 = vld [vmem:[%s0 + $0x1b8] sm:$0xff]
  %v72 = vld [vmem:[%s0 + $0x1c0] sm:$0xff]
  %v73 = vld [vmem:[%s0 + $0x1c8] sm:$0xff]
  %v74 = vld [vmem:[%s0 + $0x1d0] sm:$0xff]
  %v75 = vld [vmem:[%s0 + $0x1d8] sm:$0xff]
  %v76 = vld [vmem:[%s0 + $0x1e0] sm:$0xff]
  %v77 = vld [vmem:[%s0 + $0x1e8] sm:$0xff]
  %v78 = vld [vmem:[%s0 + $0x1f0] sm:$0xff]
  %v79 = vld [vmem:[%s0 + $0x1f8] sm:$0xff]
  %v80 = vld [vmem:[%s2] sm:$0xff]
  %v81 = vld [vmem:[%s2 + $0x8] sm:$0xff]
  %83 = vset.pattern.permute.xlu0 0
  %84 = vperm.xlu0 %83, %v80
  %v85 = vpop.permute.xlu0 %84
  %88 = vset.pattern.permute.xlu0 0
  %89 = vperm.xlu0 %88, %v81
  %v90 = vpop.permute.xlu0 %89
  %92 = vmatpush.msra.mxu0 %v76
  %93 = vmatpush.msra.mxu0 %v72
  %94 = vmatpush.msra.mxu0 %v68
  %95 = vmatpush.msra.mxu0 %v64
  %96 = vmatpush.msra.mxu0 %v60
  %97 = vmatpush.msra.mxu0 %v56
  %98 = vmatpush.msra.mxu0 %v52
  %99 = vmatpush.msra.mxu0 %v48
  %100 = vmatpush.msra.mxu0 %v44
  %101 = vmatpush.msra.mxu0 %v40
  %102 = vmatpush.msra.mxu0 %v36
  %103 = vmatpush.msra.mxu0 %v32
  %104 = vmatpush.msra.mxu0 %v28
  %105 = vmatpush.msra.mxu0 %v24
  %106 = vmatpush.msra.mxu0 %v20
  %107 = vmatpush.msra.mxu0 %v16
  %108 = vmatmul.f32.gmra.mxu0 %v14
  %v109 = vpop.f32.mrf.mxu0
  %v110 = vadd.f32 %v85, %v109
  %111 = vmatmul.f32.gmra.mxu0 %v15
  %v112 = vpop.f32.mrf.mxu0
  %v113 = vadd.f32 %v90, %v112
  %114 = vdwg.mxu0
  %115 = vmatpush.msra.mxu0 %v77
  %116 = vmatpush.msra.mxu0 %v73
  %117 = vmatpush.msra.mxu0 %v69
  %118 = vmatpush.msra.mxu0 %v65
  %119 = vmatpush.msra.mxu0 %v61
  %120 = vmatpush.msra.mxu0 %v57
  %121 = vmatpush.msra.mxu0 %v53
  %122 = vmatpush.msra.mxu0 %v49
  %123 = vmatpush.msra.mxu0 %v45
  %124 = vmatpush.msra.mxu0 %v41
  %125 = vmatpush.msra.mxu0 %v37
  %126 = vmatpush.msra.mxu0 %v33
  %127 = vmatpush.msra.mxu0 %v29
  %128 = vmatpush.msra.mxu0 %v25
  %129 = vmatpush.msra.mxu0 %v21
  %130 = vmatpush.msra.mxu0 %v17
  %131 = vmatmul.f32.gmra.mxu0 %v14
  %v132 = vpop.f32.mrf.mxu0
  %v133 = vadd.f32 %v85, %v132
  %134 = vmatmul.f32.gmra.mxu0 %v15
  %v135 = vpop.f32.mrf.mxu0
  %v136 = vadd.f32 %v90, %v135
  %137 = vdwg.mxu0
  %138 = vmatpush.msra.mxu0 %v78
  %139 = vmatpush.msra.mxu0 %v74
  %140 = vmatpush.msra.mxu0 %v70
  %141 = vmatpush.msra.mxu0 %v66
  %142 = vmatpush.msra.mxu0 %v62
  %143 = vmatpush.msra.mxu0 %v58
  %144 = vmatpush.msra.mxu0 %v54
  %145 = vmatpush.msra.mxu0 %v50
  %146 = vmatpush.msra.mxu0 %v46
  %147 = vmatpush.msra.mxu0 %v42
  %148 = vmatpush.msra.mxu0 %v38
  %149 = vmatpush.msra.mxu0 %v34
  %150 = vmatpush.msra.mxu0 %v30
  %151 = vmatpush.msra.mxu0 %v26
  %152 = vmatpush.msra.mxu0 %v22
  %153 = vmatpush.msra.mxu0 %v18
  %154 = vmatmul.f32.gmra.mxu0 %v14
  %v155 = vpop.f32.mrf.mxu0
  %v156 = vadd.f32 %v85, %v155
  %157 = vmatmul.f32.gmra.mxu0 %v15
  %v158 = vpop.f32.mrf.mxu0
  %v159 = vadd.f32 %v90, %v158
  %160 = vdwg.mxu0
  %161 = vmatpush.msra.mxu0 %v79
  %162 = vmatpush.msra.mxu0 %v75
  %163 = vmatpush.msra.mxu0 %v71
  %164 = vmatpush.msra.mxu0 %v67
  %165 = vmatpush.msra.mxu0 %v63
  %166 = vmatpush.msra.mxu0 %v59
  %167 = vmatpush.msra.mxu0 %v55
  %168 = vmatpush.msra.mxu0 %v51
  %169 = vmatpush.msra.mxu0 %v47
  %170 = vmatpush.msra.mxu0 %v43
  %171 = vmatpush.msra.mxu0 %v39
  %172 = vmatpush.msra.mxu0 %v35
  %173 = vmatpush.msra.mxu0 %v31
  %174 = vmatpush.msra.mxu0 %v27
  %175 = vmatpush.msra.mxu0 %v23
  %176 = vmatpush.msra.mxu0 %v19
  %177 = vmatmul.f32.gmra.mxu0 %v14
  %v178 = vpop.f32.mrf.mxu0
  %v179 = vadd.f32 %v85, %v178
  %180 = vmatmul.f32.gmra.mxu0 %v15
  %v181 = vpop.f32.mrf.mxu0
  %v182 = vadd.f32 %v90, %v181
  %183 = vdwg.mxu0
  %v184 = vxor.u32 %v113, 2147483648
  %v185 = vxor.u32 %v136, 2147483648
  %v186 = vxor.u32 %v159, 2147483648
  %v187 = vxor.u32 %v182, 2147483648
  %v188 = vmul.f32 %v184, 1.442695
  %v189 = vpow.pop %v188
  %v190 = vmul.f32 %v185, 1.442695
  %v191 = vpow.pop %v190
  %v192 = vmul.f32 %v186, 1.442695
  %v193 = vpow.pop %v192
  %v194 = vmul.f32 %v187, 1.442695
  %v195 = vpow.pop %v194
  %v196 = vadd.f32 %v189, 1.0
  %v197 = vadd.f32 %v191, 1.0
  %v198 = vadd.f32 %v193, 1.0
  %v199 = vadd.f32 %v195, 1.0
  %v200 = vrcp.pop %v196
  %v201 = vmul.f32 %v196, %v200
  %v202 = vsub.f32 1.0, %v201
  %v203 = vmul.f32 %v200, %v202
  %v204 = vadd.f32 %v200, %v203
  %vm205 = vweird.f32 %v196
  %vm206 = vweird.f32 %v200
  %vm207 = vmor %vm205, %vm206
  %v208 = vsel %vm207, %v200, %v204
  %v209 = vand.u32 2147483647, %v196
  %vm210 = vcmp.eq.f32.partialorder %v209, 8.507059e+37
  %v211 = vand.u32 %v196, 2147483648
  %v212 = vor.u32 1.1754944e-38, %v211
  %v213 = vsel %vm210, %v212, %v208
  %v214 = vmul.f32 1.0, %v213
  %v215 = vrcp.pop %v197
  %v216 = vmul.f32 %v197, %v215
  %v217 = vsub.f32 1.0, %v216
  %v218 = vmul.f32 %v215, %v217
  %v219 = vadd.f32 %v215, %v218
  %vm220 = vweird.f32 %v197
  %vm221 = vweird.f32 %v215
  %vm222 = vmor %vm220, %vm221
  %v223 = vsel %vm222, %v215, %v219
  %v224 = vand.u32 2147483647, %v197
  %vm225 = vcmp.eq.f32.partialorder %v224, 8.507059e+37
  %v226 = vand.u32 %v197, 2147483648
  %v227 = vor.u32 1.1754944e-38, %v226
  %v228 = vsel %vm225, %v227, %v223
  %v229 = vmul.f32 1.0, %v228
  %v230 = vrcp.pop %v198
  %v231 = vmul.f32 %v198, %v230
  %v232 = vsub.f32 1.0, %v231
  %v233 = vmul.f32 %v230, %v232
  %v234 = vadd.f32 %v230, %v233
  %vm235 = vweird.f32 %v198
  %vm236 = vweird.f32 %v230
  %vm237 = vmor %vm235, %vm236
  %v238 = vsel %vm237, %v230, %v234
  %v239 = vand.u32 2147483647, %v198
  %vm240 = vcmp.eq.f32.partialorder %v239, 8.507059e+37
  %v241 = vand.u32 %v198, 2147483648
  %v242 = vor.u32 1.1754944e-38, %v241
  %v243 = vsel %vm240, %v242, %v238
  %v244 = vmul.f32 1.0, %v243
  %v245 = vrcp.pop %v199
  %v246 = vmul.f32 %v199, %v245
  %v247 = vsub.f32 1.0, %v246
  %v248 = vmul.f32 %v245, %v247
  %v249 = vadd.f32 %v245, %v248
  %vm250 = vweird.f32 %v199
  %vm251 = vweird.f32 %v245
  %vm252 = vmor %vm250, %vm251
  %v253 = vsel %vm252, %v245, %v249
  %v254 = vand.u32 2147483647, %v199
  %vm255 = vcmp.eq.f32.partialorder %v254, 8.507059e+37
  %v256 = vand.u32 %v199, 2147483648
  %v257 = vor.u32 1.1754944e-38, %v256
  %v258 = vsel %vm255, %v257, %v253
  %v259 = vmul.f32 1.0, %v258
  %v260 = vmul.f32 %v110, %v214
  %v261 = vmul.f32 %v133, %v229
  %v262 = vmul.f32 %v156, %v244
  %v263 = vmul.f32 %v179, %v259
  %264 = vst [vmem:[%s3] sm:$0xff] %v260
  %265 = vst [vmem:[%s3 + $0x8] sm:$0xff] %v261
  %266 = vst [vmem:[%s3 + $0x10] sm:$0xff] %v262
  %267 = vst [vmem:[%s3 + $0x18] sm:$0xff] %v263
  // Predicated region
  $region14: #{gated_conv2d.1} parent=0 // pred_check
    _
  $region15: #{gated_conv2d.1} parent=0 // pred_check_branch
    %269 = sbr.rel (0) target = $region17
  $region16: #{gated_conv2d.1} parent=0 // pred_region
    _
  $region17: #{gated_conv2d.1} parent=0 // pred_fallthru
    _
  // Predicated region
  $region18: #{gated_conv2d.1} parent=0 // pred_check
    _
  $region19: #{gated_conv2d.1} parent=0 // pred_check_branch
    %271 = sbr.rel (0) target = $region21
  $region20: #{gated_conv2d.1} parent=0 // pred_region
    _
  $region21: #{gated_conv2d.1} parent=0 // pred_fallthru
    _

</llo_original>
